<compile_context>
chip_gen: v7x
topology: tpu7x:2x2x1
jax: 0.10.0
libtpu: 0.0.40
codegen_flags: <defaults>
</compile_context>

<pallas_src>
import functools
import math

import jax
import jax.numpy as jnp
from jax.experimental import pallas as pl
from jax.experimental.pallas import tpu as pltpu


def _round_up(x, m):
    return (x + m - 1) // m * m


def _cdiv(a, b):
    return (a + b - 1) // b


def _label_smoothing_kernel(x_ref, tgt_ref, out_ref, acc_ref, *, tile_v, size,
                            padding_idx, confidence, smooth_val, row_const,
                            ragged_v):
    j = pl.program_id(1)                       # vocab-tile index (reduction axis)
    n_vtiles = pl.num_programs(1)

    @pl.when(j == 0)
    def _init():
        acc_ref[...] = jnp.zeros_like(acc_ref)

    x = x_ref[...].astype(jnp.float32)         # (tile_n, tile_v), upcast after load
    tn, tv = x.shape
    tgt = tgt_ref[...]                         # (tile_n, 1) int32

    # Local column index is a constant iota; the vocab-tile offset is folded
    # into the (tile_n, 1) target instead of a per-element add.
    col = jax.lax.broadcasted_iota(jnp.int32, (tn, tv), 1)
    local_tgt = tgt - j * tile_v               # (tile_n, 1)

    # Weight: -confidence at the target column, -smooth_val elsewhere.  The
    # static padding column is corrected once below; rows whose target is the
    # padding index are zeroed at finalize.
    w = jnp.where(col == local_tgt, jnp.float32(-confidence),
                  jnp.float32(-smooth_val))
    wx = w * x
    if ragged_v:
        # Ragged tail V-tile: columns >= size are undefined (x is NOT padded
        # in HBM).  Select (not multiply) so garbage/NaN lanes cannot leak.
        wx = jnp.where(col < size - j * tile_v, wx, jnp.float32(0.0))

    # Lane-dense accumulation: fold the tile_v/128 lane-blocks into the
    # resident (tile_n, 128) scratch with VALU adds only; the cross-lane (XLU)
    # reduce happens once per row tile in the finalize step.
    acc = acc_ref[...]
    for c in range(tv // 128):
        acc = acc + wx[:, c * 128:(c + 1) * 128]
    acc_ref[...] = acc

    # The padding column (static index) was weighted -smooth_val above; cancel
    # it with one static column slice.  Rows with target == padding_idx are
    # fully zeroed at finalize, so their value here is irrelevant.
    @pl.when(j == padding_idx // tile_v)
    def _fix_padding_col():
        pad_local = padding_idx % tile_v
        xp = x_ref[:, pad_local:pad_local + 1].astype(jnp.float32)
        acc_ref[:, 0:1] += jnp.float32(smooth_val) * xp

    @pl.when(j == n_vtiles - 1)
    def _finalize():
        row_sum = jnp.sum(acc_ref[...], axis=-1, keepdims=True)   # (tile_n, 1)
        valid = tgt != padding_idx             # padding-target rows (and padded tail rows) -> 0
        out_ref[...] = jnp.where(valid, row_sum + jnp.float32(row_const),
                                 jnp.float32(0.0))


def label_smoothing_loss(x, target, *, size, padding_idx, smoothing=0.0,
                         tile_n=256, tile_v=8192):
    """Forward pass of LabelSmoothing.

    x: [N, size] log-probabilities (f32 or bf16), target: [N] int class ids.
    Returns the summed KL divergence (scalar f32).
    """
    n, v = x.shape
    assert v == size, (v, size)

    # Compile-time constants (xlogy convention: 0 * log 0 == 0).
    confidence = 1.0 - smoothing
    smooth_val = smoothing / (size - 2)        # matches the PyTorch module (size > 2)
    log_conf = math.log(confidence) if confidence > 0.0 else 0.0
    log_smooth = math.log(smooth_val) if smooth_val > 0.0 else 0.0
    # Per contributing (non-padding) row: sum of td*log(td) over the row.
    row_const = confidence * log_conf + (size - 2) * smooth_val * log_smooth

    # Clamp tiles to the problem size; keep (8, 128) alignment.
    tile_n = _round_up(min(tile_n, _round_up(n, 8)), 8)
    tile_v = _round_up(min(tile_v, _round_up(v, 128)), 128)
    n_tiles = _cdiv(n, tile_n)
    v_tiles = _cdiv(v, tile_v)
    n_pad = n_tiles * tile_n
    ragged_v = (v % tile_v) != 0

    # x is streamed unpadded; only the O(N) target vector is padded so that
    # tail rows are masked to zero at finalize.
    tgt = target.astype(jnp.int32).reshape(n, 1)
    if n_pad != n:
        tgt = jnp.pad(tgt, ((0, n_pad - n), (0, 0)), constant_values=padding_idx)

    kernel = functools.partial(
        _label_smoothing_kernel,
        tile_v=tile_v,
        size=size,
        padding_idx=padding_idx,
        confidence=confidence,
        smooth_val=smooth_val,
        row_const=row_const,
        ragged_v=ragged_v,
    )

    # Double-buffered x block + small out/scratch; stays within v7x's 64 MiB
    # VMEM at the defaults while allowing larger blocks on v5e/v6e.
    x_block_bytes = tile_n * tile_v * x.dtype.itemsize
    vmem_limit = max(32 * 1024 * 1024,
                     min(2 * x_block_bytes + 8 * 1024 * 1024, 96 * 1024 * 1024))

    per_row = pl.pallas_call(
        kernel,
        out_shape=jax.ShapeDtypeStruct((n_pad, 1), jnp.float32),
        grid=(n_tiles, v_tiles),
        in_specs=[
            pl.BlockSpec((tile_n, tile_v), lambda i, j: (i, j)),   # x tile
            pl.BlockSpec((tile_n, 1), lambda i, j: (i, 0)),        # target column
        ],
        out_specs=pl.BlockSpec((tile_n, 1), lambda i, j: (i, 0)),  # per-row loss
        scratch_shapes=[pltpu.VMEM((tile_n, 128), jnp.float32)],   # lane-dense accumulator
        compiler_params=pltpu.CompilerParams(
            dimension_semantics=("parallel", "arbitrary"),
            vmem_limit_bytes=vmem_limit,
        ),
        cost_estimate=pl.CostEstimate(
            flops=3 * n * v,
            transcendentals=0,
            bytes_accessed=n * v * x.dtype.itemsize + 8 * n_pad,
        ),
    )(x, tgt)

    # Final cross-row collapse done once, outside the kernel.
    return jnp.sum(per_row)


def _reference_loss(x, target, *, size, padding_idx, smoothing):
    # Pure-JAX reference of the original (un-simplified) math.
    n, v = x.shape
    confidence = 1.0 - smoothing
    col = jnp.arange(v)[None, :]
    td = jnp.full((n, v), smoothing / (v - 2), dtype=jnp.float32)
    td = jnp.where(col == target[:, None], confidence, td)
    td = jnp.where(col == padding_idx, 0.0, td)
    td = jnp.where(target[:, None] == padding_idx, 0.0, td)
    kl = jnp.where(td > 0,
                   td * (jnp.log(jnp.maximum(td, 1e-30)) - x.astype(jnp.float32)),
                   0.0)
    return jnp.sum(kl)


if __name__ == "__main__":
    key = jax.random.PRNGKey(0)

    def run_case(n, size, padding_idx, smoothing, tile_n, tile_v, case_key,
                 dtype=jnp.float32):
        k_x, k_t = jax.random.split(case_key)
        logits = jax.random.normal(k_x, (n, size), dtype=jnp.float32)
        x = jax.nn.log_softmax(logits, axis=-1).astype(dtype)
        target = jax.random.randint(k_t, (n,), 1, size, dtype=jnp.int32)
        target = target.at[n // 2].set(padding_idx)   # exercise padding-row masking

        loss = label_smoothing_loss(
            x, target, size=size, padding_idx=padding_idx, smoothing=smoothing,
            tile_n=tile_n, tile_v=tile_v)
        loss = jax.block_until_ready(loss)

        ref = _reference_loss(
            x.astype(jnp.float32), target, size=size, padding_idx=padding_idx,
            smoothing=smoothing)
        assert jnp.allclose(loss, ref, rtol=1e-4, atol=1e-4), (
            n, size, float(loss), float(ref))

    k1, k2, k3, k4 = jax.random.split(key, 4)
    # Small single-tile case (toy module shapes: 8 tokens, vocab 32) with the
    # default (large) tiles clamped down; ragged V tail masked in-kernel.
    run_case(8, 32, 0, 0.1, 256, 8192, k1)
    # Multi-tile case: 3x3 grid, ragged N and V tails, x streamed unpadded.
    run_case(21, 300, 0, 0.1, 8, 128, k2)
    # Padding column not in vocab-tile 0 (exercises the pl.when correction).
    run_case(16, 384, 130, 0.1, 8, 128, k3)
    # bf16 input path (x read as bf16, upcast in-kernel, f32 accumulation).
    run_case(16, 384, 0, 0.1, 8, 256, k4, dtype=jnp.bfloat16)

    print("KERNEL_OK")
</pallas_src>

<mosaic_0001>
module attributes {stable_mosaic.version = 11 : i64} {
  func.func @_label_smoothing_kernel(%arg0: i32, %arg1: i32, %arg2: memref<8x128xf32, #tpu.memory_space<vmem>>, %arg3: memref<8x1xi32, #tpu.memory_space<vmem>>, %arg4: memref<8x1xf32, #tpu.memory_space<vmem>>, %arg5: memref<8x128xf32, #tpu.memory_space<vmem>>) attributes {dimension_semantics = [#tpu.dimension_semantics<parallel>, #tpu.dimension_semantics<arbitrary>], iteration_bounds = array<i64: 1, 1>, scalar_prefetch = 0 : i64, scratch_operands = 1 : i64, tpu.core_type = #tpu.core_type<tc>, window_params = [{transform_indices = @transform_0, window_bounds = array<i64: 8, 128>}, {transform_indices = @transform_1, window_bounds = array<i64: 8, 1>}, {transform_indices = @transform_2, window_bounds = array<i64: 8, 1>}]} {
    %c0_i32 = arith.constant 0 : i32
    %0 = arith.cmpi eq, %arg1, %c0_i32 : i32
    %1 = arith.extui %0 : i1 to i32
    %c0_i32_0 = arith.constant 0 : i32
    %2 = arith.cmpi ne, %1, %c0_i32_0 : i32
    scf.if %2 {
      %cst_15 = arith.constant 0.000000e+00 : f32
      %30 = vector.broadcast %cst_15 : f32 to vector<8x128xf32>
      %c0_16 = arith.constant 0 : index
      %c0_17 = arith.constant 0 : index
      %31 = vector.load %arg5[%c0_16, %c0_17] : memref<8x128xf32, #tpu.memory_space<vmem>>, vector<8x128xf32>
      tpu.vector_store %arg5[%c0_16, %c0_17], %30 {strides = array<i32>} : memref<8x128xf32, #tpu.memory_space<vmem>>, vector<8x128xf32>,
    } else {
    }
    %c0 = arith.constant 0 : index
    %c0_1 = arith.constant 0 : index
    %3 = vector.load %arg2[%c0, %c0_1] : memref<8x128xf32, #tpu.memory_space<vmem>>, vector<8x128xf32>
    %c0_2 = arith.constant 0 : index
    %c0_3 = arith.constant 0 : index
    %4 = vector.load %arg3[%c0_2, %c0_3] : memref<8x1xi32, #tpu.memory_space<vmem>>, vector<8x1xi32>
    %5 = tpu.iota {dimensions = array<i32: 1>} : vector<8x128xi32>
    %c128_i32 = arith.constant 128 : i32
    %6 = arith.muli %arg1, %c128_i32 : i32
    %7 = vector.broadcast %6 : i32 to vector<8x1xi32>
    %8 = arith.subi %4, %7 : vector<8x1xi32>
    %9 = vector.broadcast %8 : vector<8x1xi32> to vector<8x128xi32>
    %10 = arith.cmpi eq, %5, %9 : vector<8x128xi32>
    %cst = arith.constant -0.899999976 : f32
    %cst_4 = arith.constant -0.00333333341 : f32
    %11 = vector.broadcast %cst : f32 to vector<8x128xf32>
    %12 = vector.broadcast %cst_4 : f32 to vector<8x128xf32>
    %13 = arith.select %10, %11, %12 : vector<8x128xi1>, vector<8x128xf32>
    %14 = arith.mulf %13, %3 : vector<8x128xf32>
    %c128_i32_5 = arith.constant 128 : i32
    %15 = arith.muli %arg1, %c128_i32_5 : i32
    %c32_i32 = arith.constant 32 : i32
    %16 = arith.subi %c32_i32, %15 : i32
    %17 = vector.broadcast %16 : i32 to vector<8x128xi32>
    %18 = arith.cmpi slt, %5, %17 : vector<8x128xi32>
    %cst_6 = arith.constant 0.000000e+00 : f32
    %19 = vector.broadcast %cst_6 : f32 to vector<8x128xf32>
    %20 = arith.select %18, %14, %19 : vector<8x128xi1>, vector<8x128xf32>
    %c0_7 = arith.constant 0 : index
    %c0_8 = arith.constant 0 : index
    %21 = vector.load %arg5[%c0_7, %c0_8] : memref<8x128xf32, #tpu.memory_space<vmem>>, vector<8x128xf32>
    %22 = arith.addf %21, %20 : vector<8x128xf32>
    %c0_9 = arith.constant 0 : index
    %c0_10 = arith.constant 0 : index
    %23 = vector.load %arg5[%c0_9, %c0_10] : memref<8x128xf32, #tpu.memory_space<vmem>>, vector<8x128xf32>
    tpu.vector_store %arg5[%c0_9, %c0_10], %22 {strides = array<i32>} : memref<8x128xf32, #tpu.memory_space<vmem>>, vector<8x128xf32>,
    %c0_i32_11 = arith.constant 0 : i32
    %24 = arith.cmpi eq, %arg1, %c0_i32_11 : i32
    %25 = arith.extui %24 : i1 to i32
    %c0_i32_12 = arith.constant 0 : i32
    %26 = arith.cmpi ne, %25, %c0_i32_12 : i32
    scf.if %26 {
      %c0_15 = arith.constant 0 : index
      %c0_16 = arith.constant 0 : index
      %30 = vector.load %arg2[%c0_15, %c0_16] : memref<8x128xf32, #tpu.memory_space<vmem>>, vector<8x1xf32>
      %c0_17 = arith.constant 0 : index
      %c0_18 = arith.constant 0 : index
      %31 = vector.load %arg5[%c0_17, %c0_18] : memref<8x128xf32, #tpu.memory_space<vmem>>, vector<8x1xf32>
      %cst_19 = arith.constant 0.00333333341 : f32
      %32 = vector.broadcast %cst_19 : f32 to vector<8x1xf32>
      %33 = arith.mulf %32, %30 : vector<8x1xf32>
      %34 = arith.addf %31, %33 : vector<8x1xf32>
      %c0_20 = arith.constant 0 : index
      %c0_21 = arith.constant 0 : index
      %35 = vector.load %arg5[%c0_20, %c0_21] : memref<8x128xf32, #tpu.memory_space<vmem>>, vector<8x1xf32>
      tpu.vector_store %arg5[%c0_20, %c0_21], %34 {strides = array<i32>} : memref<8x128xf32, #tpu.memory_space<vmem>>, vector<8x1xf32>,
    } else {
    }
    %c0_i32_13 = arith.constant 0 : i32
    %27 = arith.cmpi eq, %arg1, %c0_i32_13 : i32
    %28 = arith.extui %27 : i1 to i32
    %c0_i32_14 = arith.constant 0 : i32
    %29 = arith.cmpi ne, %28, %c0_i32_14 : i32
    scf.if %29 {
      %c0_15 = arith.constant 0 : index
      %c0_16 = arith.constant 0 : index
      %30 = vector.load %arg5[%c0_15, %c0_16] : memref<8x128xf32, #tpu.memory_space<vmem>>, vector<8x128xf32>
      %cst_17 = arith.constant dense<0.000000e+00> : vector<8xf32>
      %31 = vector.multi_reduction <add>, %30, %cst_17 [1] : vector<8x128xf32> to vector<8xf32>
      %32 = vector.shape_cast %31 : vector<8xf32> to vector<8x1xf32>
      %c0_i32_18 = arith.constant 0 : i32
      %33 = vector.broadcast %c0_i32_18 : i32 to vector<8x1xi32>
      %34 = arith.cmpi ne, %4, %33 : vector<8x1xi32>
      %cst_19 = arith.constant -0.665202737 : f32
      %35 = vector.broadcast %cst_19 : f32 to vector<8x1xf32>
      %36 = arith.addf %32, %35 : vector<8x1xf32>
      %cst_20 = arith.constant 0.000000e+00 : f32
      %37 = vector.broadcast %cst_20 : f32 to vector<8x1xf32>
      %38 = arith.select %34, %36, %37 : vector<8x1xi1>, vector<8x1xf32>
      %c0_21 = arith.constant 0 : index
      %c0_22 = arith.constant 0 : index
      %39 = vector.load %arg4[%c0_21, %c0_22] : memref<8x1xf32, #tpu.memory_space<vmem>>, vector<8x1xf32>
      tpu.vector_store %arg4[%c0_21, %c0_22], %38 {strides = array<i32>} : memref<8x1xf32, #tpu.memory_space<vmem>>, vector<8x1xf32>,
    } else {
    }
    return
  }
  func.func @transform_0(%arg0: i32, %arg1: i32) -> (i32, i32) {
    %c0_i32 = arith.constant 0 : i32
    return %arg0, %arg1 : i32, i32
  }
  func.func @transform_1(%arg0: i32, %arg1: i32) -> (i32, i32) {
    %c0_i32 = arith.constant 0 : i32
    %c0_i32_0 = arith.constant 0 : i32
    return %arg0, %c0_i32 : i32, i32
  }
  func.func @transform_2(%arg0: i32, %arg1: i32) -> (i32, i32) {
    %c0_i32 = arith.constant 0 : i32
    %c0_i32_0 = arith.constant 0 : i32
    return %arg0, %c0_i32 : i32, i32
  }
}

</mosaic_0001>

<llo_original>
// kernel: tpu_custom_call.1
$region0: #{tpu_custom_call.1}
  #allocation0 [shape = 'u32[]', space=smem, size = 0x4, offset = 0x4, fixed_abs, tag = 'smem constant byte address 0x4 - core index']
  #allocation1 [shape = 'u32[144,128]{1,0:T(1,128)}', space=vmem, size = 0x12000, scoped, tag = 'internal scratch']
  #allocation2 [shape = 'f32[8,128]{1,0:T(8,128)}', space=vmem, size = 0x1000, scoped, tag = 'scratch operand']
  %s0 = inlined_call_operand.vmem [shape: f32[8,32], index: 0, kind: input, shape index: {}]
  %s1 = inlined_call_operand.vmem [shape: s32[8,1], index: 1, kind: input, shape index: {}]
  %s2 = inlined_call_operand.vmem [shape: f32[8,1], index: 2, kind: output, shape index: {}]
  %s3 = sld [smem:[#allocation0]]
  $region26: #{tpu_custom_call.1} parent=0
    _
  %s5 = ssub.s32 1, %s3
  %s6 = scalar_select 0, %s5, %s3
  // Predicated region
  $region2: #{tpu_custom_call.1} parent=0 // pred_check
    _
  $region3: #{tpu_custom_call.1} parent=0 // pred_check_branch
    %8 = sbr.rel (0) target = $region5
  $region4: #{tpu_custom_call.1} parent=0 // pred_region
    _
  $region5: #{tpu_custom_call.1} parent=0 // pred_fallthru
    _
  // Predicated region
  $region6: #{tpu_custom_call.1} parent=0 // pred_check
    _
  $region7: #{tpu_custom_call.1} parent=0 // pred_check_branch
    %10 = sbr.rel (0) target = $region9
  $region8: #{tpu_custom_call.1} parent=0 // pred_region
    _
  $region9: #{tpu_custom_call.1} parent=0 // pred_fallthru
    _
  %p11 = scmp.eq.s32.totalorder 0, 0
  // Predicated region
  $region10: #{tpu_custom_call.1} parent=0 // pred_check
    %p12 = pneg %p11
  $region11: #{tpu_custom_call.1} parent=0 // pred_check_branch
    %14 = sbr.rel (%p12) target = $region13
  $region12: #{tpu_custom_call.1} parent=0 // pred_region
    %15 = vst [vmem:[#allocation2] sm:$0xff] 0.0
  $region13: #{tpu_custom_call.1} parent=0 // pred_fallthru
    _
  %v16 = vld [vmem:[%s0] sm:$0xff]
  %v17 = vld [vmem:[%s1] sm:$0xff]
  %v18 = vlaneseq
  %v19 = vand.u32 %v18, 127
  %s20 = smul.u32 0, 128
  %v21 = vstv %s20
  %v22 = vsub.s32 %v17, %v21
  %23 = vset.pattern.permute.xlu0 0
  %24 = vperm.xlu0 %23, %v22
  %v25 = vpop.permute.xlu0 %24
  %vm26 = vcmp.eq.s32.totalorder %v19, %v25
  %v27 = vsel %vm26, -0.9, -0.0033333334
  %v28 = vmul.f32 %v27, %v16
  %s29 = ssub.s32 32, %s20
  %v30 = vstv %s29
  %vm31 = vcmp.lt.s32.totalorder %v19, %v30
  %v32 = vsel %vm31, %v28, 0.0
  %v33 = vld [vmem:[#allocation2] sm:$0xff]
  %v34 = vadd.f32 %v33, %v32
  %35 = vst [vmem:[#allocation2] sm:$0xff] %v34
  // Predicated region
  $region14: #{tpu_custom_call.1} parent=0 // pred_check
    %p36 = pneg %p11
  $region15: #{tpu_custom_call.1} parent=0 // pred_check_branch
    %38 = sbr.rel (%p36) target = $region17
  $region16: #{tpu_custom_call.1} parent=0 // pred_region
    %v39 = vld [vmem:[%s0] sm:$0xff]
    %v40 = vld [vmem:[#allocation2] sm:$0xff]
    %v41 = vmul.f32 %v39, 0.0033333334
    %v42 = vadd.f32 %v40, %v41
    %vm43 = vcmask 7168
    %44 = vst.msk [vmem:[#allocation2] sm:$0xff] %vm43, %v42
    %v45 = vld [vmem:[#allocation2] sm:$0xff]
    %46 = vadd.xlane.f32.xlu0 %v45
    %v47 = vpop.xlane.xlu0 %46
    %vm48 = vcmp.ne.s32.totalorder %v17, 0
    %v49 = vadd.f32 %v47, -0.66520274
    %v50 = vsel %vm48, %v49, 0.0
    %51 = vst.msk [vmem:[%s2] sm:$0xff] %vm43, %v50
  $region17: #{tpu_custom_call.1} parent=0 // pred_fallthru
    _
  // Predicated region
  $region18: #{tpu_custom_call.1} parent=0 // pred_check
    _
  $region19: #{tpu_custom_call.1} parent=0 // pred_check_branch
    %53 = sbr.rel (0) target = $region21
  $region20: #{tpu_custom_call.1} parent=0 // pred_region
    _
  $region21: #{tpu_custom_call.1} parent=0 // pred_fallthru
    _
  // Predicated region
  $region22: #{tpu_custom_call.1} parent=0 // pred_check
    _
  $region23: #{tpu_custom_call.1} parent=0 // pred_check_branch
    %55 = sbr.rel (0) target = $region25
  $region24: #{tpu_custom_call.1} parent=0 // pred_region
    _
  $region25: #{tpu_custom_call.1} parent=0 // pred_fallthru
    _

</llo_original>
